<compile_context>
chip_gen: v6e
topology: v6e:2x2x1
jax: 0.10.0
libtpu: 0.0.40
codegen_flags: <defaults>
</compile_context>

<pallas_src>
import math
from functools import partial

import jax
import jax.numpy as jnp
from jax import lax
from jax.experimental import pallas as pl
from jax.experimental.pallas import tpu as pltpu


_MASK_VALUE = -1e30  # large finite negative: avoids inf-inf NaN paths


# ----------------------------- device helpers --------------------------------

def _device_kind() -> str:
    try:
        return jax.devices()[0].device_kind.lower()
    except Exception:
        return ""


def _default_attn_tile() -> int:
    # v5e/v5p MXUs are 128-wide (128 tiles already saturate them);
    # v6e/v7x MXUs are 256-wide -> 256 tiles fill the systolic array.
    return 128 if "v5" in _device_kind() else 256


def _vmem_limit_bytes():
    kind = _device_kind()
    if "v7" in kind:
        return 48 * 1024 * 1024      # v7x: 64 MiB physical per TC -> leave headroom
    if any(v in kind for v in ("v4", "v5", "v6")):
        return 96 * 1024 * 1024      # 128 MiB parts: allow bigger tiles
    return None                      # unknown backend: keep compiler default


def _fit_tile(n, target, align=128):
    """Largest tile <= target that divides n, preferring `align`-multiples,
    then multiples of 8, then any divisor.  Returns n itself when small."""
    if n <= target:
        return n
    for a in (align, 8, 1):
        t = (target // a) * a
        while t >= a:
            if n % t == 0:
                return t
            t -= a
    return n


# ----------------------------- tiled matmul ----------------------------------

def _matmul_kernel(x_ref, w_ref, o_ref, acc_ref):
    @pl.when(pl.program_id(2) == 0)
    def _init():
        acc_ref[...] = jnp.zeros_like(acc_ref)

    acc_ref[...] += jnp.dot(x_ref[...], w_ref[...],
                            preferred_element_type=jnp.float32)

    @pl.when(pl.program_id(2) == pl.num_programs(2) - 1)
    def _finalize():
        o_ref[...] = acc_ref[...].astype(o_ref.dtype)


def linear_pallas(x2d, w_kn, *, out_dtype=None, tm=512, tn=512, tk=512):
    """x2d: (M, K); w_kn: (K, N) (already transposed from torch (N, K))."""
    M, K = x2d.shape
    K2, N = w_kn.shape
    assert K == K2
    if out_dtype is None:
        out_dtype = x2d.dtype
    tm = _fit_tile(M, tm, 8)
    tn = _fit_tile(N, tn, 128)
    tk = _fit_tile(K, tk, 128)
    grid = (M // tm, N // tn, K // tk)
    return pl.pallas_call(
        _matmul_kernel,
        out_shape=jax.ShapeDtypeStruct((M, N), out_dtype),
        grid_spec=pltpu.PrefetchScalarGridSpec(
            num_scalar_prefetch=0,
            grid=grid,
            in_specs=[
                pl.BlockSpec((tm, tk), lambda i, j, k: (i, k)),
                pl.BlockSpec((tk, tn), lambda i, j, k: (k, j)),
            ],
            out_specs=pl.BlockSpec((tm, tn), lambda i, j, k: (i, j)),
            scratch_shapes=[pltpu.VMEM((tm, tn), jnp.float32)],
        ),
        compiler_params=pltpu.CompilerParams(
            dimension_semantics=("parallel", "parallel", "arbitrary"),
            vmem_limit_bytes=_vmem_limit_bytes(),
        ),
    )(x2d, w_kn)


# ------------------------- flash attention kernel ----------------------------

def _flash_attn_kernel(q_ref, k_ref, v_ref, o_ref, m_sc, l_sc, acc_sc,
                       *, hkv, n_rep, tq, tk, use_approx_recip):
    qi = pl.program_id(1)
    ki = pl.program_id(2)
    heads = hkv * n_rep
    d = q_ref.shape[-1]

    @pl.when(ki == 0)
    def _init():
        m_sc[...] = jnp.full_like(m_sc, _MASK_VALUE)
        l_sc[...] = jnp.zeros_like(l_sc)
        acc_sc[...] = jnp.zeros_like(acc_sc)

    def _update(apply_mask):
        # GQA: group Q heads by their shared KV head instead of expanding K/V.
        # (H, tq, D) -> (Hkv, n_rep*tq, D) is a free leading-dim regroup
        # (tq is a multiple of 8).  q already carries 1/sqrt(D) (folded into
        # the rotary coefficients in the wrapper), so no per-step scaling.
        q = q_ref[...].reshape(hkv, n_rep * tq, d)
        k = k_ref[...]                                       # (Hkv, tk, D)
        s = jnp.einsum("gqd,gkd->gqk", q, k,
                       preferred_element_type=jnp.float32)   # (Hkv, n_rep*tq, tk)

        if apply_mask:
            # Only the diagonal block straddles the causal boundary
            # (tq == tk), so in-tile relative positions are sufficient.
            q_pos = lax.broadcasted_iota(
                jnp.int32, (n_rep, tq, tk), 1).reshape(n_rep * tq, tk)
            k_pos = lax.broadcasted_iota(jnp.int32, (n_rep * tq, tk), 1)
            s = jnp.where((q_pos >= k_pos)[None], s, _MASK_VALUE)

        m_prev = m_sc[...]
        m_new = jnp.maximum(m_prev, s.max(axis=-1, keepdims=True))
        alpha = jnp.exp(m_prev - m_new)
        p = jnp.exp(s - m_new)
        l_sc[...] = alpha * l_sc[...] + p.sum(axis=-1, keepdims=True)
        acc_sc[...] = alpha * acc_sc[...] + jnp.einsum(
            "gqk,gkd->gqd", p.astype(v_ref.dtype), v_ref[...],
            preferred_element_type=jnp.float32)
        m_sc[...] = m_new

    # Interior (fully visible) blocks: no mask arithmetic at all.
    @pl.when(ki < qi)
    def _interior():
        _update(apply_mask=False)

    # Diagonal block: in-tile causal mask.  Blocks with ki > qi are fully
    # masked and skipped entirely (their K/V DMA is also elided by the
    # clamped index_map in flash_attention()).
    @pl.when(ki == qi)
    def _diagonal():
        _update(apply_mask=True)

    @pl.when(ki == pl.num_programs(2) - 1)
    def _finalize():
        inv_l = pl.reciprocal(l_sc[...], approx=use_approx_recip)
        out = (acc_sc[...] * inv_l).reshape(heads, tq, d)
        o_ref[...] = out.astype(o_ref.dtype)


def flash_attention(q, k, v, *, n_rep, tile=None, use_approx_recip=False):
    """Causal GQA attention.  q: (B, H, S, D); k, v: (B, Hkv, S, D).

    q must already carry the 1/sqrt(D) scaling (folded in by the caller).
    """
    B, H, S, D = q.shape
    Hkv = k.shape[1]
    assert H == Hkv * n_rep
    if tile is None:
        tile = _default_attn_tile()
    t = _fit_tile(S, tile, 128)      # tq == tk (required by the causal skip)
    grid = (B, S // t, S // t)

    kernel = partial(_flash_attn_kernel, hkv=Hkv, n_rep=n_rep, tq=t, tk=t,
                     use_approx_recip=use_approx_recip)

    def q_map(b, qi, ki):
        return (b, 0, qi, 0)

    def kv_map(b, qi, ki):
        # Blocks entirely above the causal diagonal are never read; clamping
        # the block index re-requests the previous block so Pallas elides the
        # HBM->VMEM copy (~2x less K/V DMA for causal attention).
        return (b, 0, jnp.minimum(ki, qi), 0)

    return pl.pallas_call(
        kernel,
        out_shape=jax.ShapeDtypeStruct((B, H, S, D), q.dtype),
        grid_spec=pltpu.PrefetchScalarGridSpec(
            num_scalar_prefetch=0,
            grid=grid,
            in_specs=[
                pl.BlockSpec((None, H, t, D), q_map),
                pl.BlockSpec((None, Hkv, t, D), kv_map),
                pl.BlockSpec((None, Hkv, t, D), kv_map),
            ],
            out_specs=pl.BlockSpec((None, H, t, D), q_map),
            scratch_shapes=[
                pltpu.VMEM((Hkv, n_rep * t, 1), jnp.float32),   # running max
                pltpu.VMEM((Hkv, n_rep * t, 1), jnp.float32),   # running denom
                pltpu.VMEM((Hkv, n_rep * t, D), jnp.float32),   # output acc
            ],
        ),
        compiler_params=pltpu.CompilerParams(
            dimension_semantics=("parallel", "parallel", "arbitrary"),
            vmem_limit_bytes=_vmem_limit_bytes(),
        ),
    )(q, k, v)


# ------------------------------- JAX glue ------------------------------------

def precompute_freqs_cis(dim, end, theta=10000.0):
    freqs = 1.0 / (theta ** (jnp.arange(0, dim, 2)[: dim // 2].astype(jnp.float32) / dim))
    t = jnp.arange(end, dtype=jnp.float32)
    freqs = jnp.outer(t, freqs)
    return jnp.cos(freqs), jnp.sin(freqs)


def apply_rotary_emb(x, freqs_cos, freqs_sin):
    # x: (B, S, H, D); interleaved real/imag pairs (llama RotaryEmbedding).
    # TODO(synk): fuse RoPE + the (B,S,H,D)->(B,H,S,D) transpose into a Pallas
    # prologue of the flash kernel to drop these extra HBM passes over q/k.
    xr = x[..., 0::2]
    xi = x[..., 1::2]
    cos = freqs_cos[None, :, None, :]
    sin = freqs_sin[None, :, None, :]
    out_r = xr * cos - xi * sin
    out_i = xr * sin + xi * cos
    return jnp.stack([out_r, out_i], axis=-1).reshape(x.shape)


class AttentionPallas:
    """JAX/Pallas equivalent of Attention (use_kv_cache=False branch).

    mxu_dtype selects the dtype fed to the MXU matmuls (bfloat16 by default,
    float32 for validation); softmax, accumulation and the final output stay
    float32.
    """

    def __init__(self, dim, n_heads, n_kv_heads, max_seq_len, rope_freq_base,
                 key, mxu_dtype=jnp.bfloat16):
        self.dim = dim
        self.n_heads = n_heads
        self.n_kv_heads = n_kv_heads
        self.n_rep = n_heads // n_kv_heads
        self.head_dim = dim // n_heads
        self.max_seq_len = max_seq_len
        self.mxu_dtype = jnp.dtype(mxu_dtype)

        k1, k2, k3, k4 = jax.random.split(key, 4)
        std = 1.0 / math.sqrt(dim)
        hd = self.head_dim
        # Weights stored pre-transposed to (in_features, out_features).
        self.wq = (jax.random.normal(k1, (dim, n_heads * hd)) * std).astype(jnp.float32)
        self.wk = (jax.random.normal(k2, (dim, n_kv_heads * hd)) * std).astype(jnp.float32)
        self.wv = (jax.random.normal(k3, (dim, n_kv_heads * hd)) * std).astype(jnp.float32)
        self.wo = (jax.random.normal(k4, (n_heads * hd, dim)) * std).astype(jnp.float32)

        # MXU-dtype copies made once at init (never cast / transpose per call).
        self.wq_c = self.wq.astype(self.mxu_dtype)
        self.wk_c = self.wk.astype(self.mxu_dtype)
        self.wv_c = self.wv.astype(self.mxu_dtype)
        self.wo_c = self.wo.astype(self.mxu_dtype)

        self.freqs_cos, self.freqs_sin = precompute_freqs_cis(
            hd, max_seq_len, rope_freq_base)

    def __call__(self, x):
        bsz, seqlen, _ = x.shape
        dt = self.mxu_dtype
        hd = self.head_dim

        x2d = x.reshape(bsz * seqlen, self.dim).astype(dt)
        # Separate Q/K/V projections: outputs reshape straight to (B,S,H,D)
        # with no fused-qkv slicing passes; bf16 path writes bf16 directly.
        q = linear_pallas(x2d, self.wq_c, out_dtype=dt)
        k = linear_pallas(x2d, self.wk_c, out_dtype=dt)
        v = linear_pallas(x2d, self.wv_c, out_dtype=dt)
        q = q.reshape(bsz, seqlen, self.n_heads, hd)
        k = k.reshape(bsz, seqlen, self.n_kv_heads, hd)
        v = v.reshape(bsz, seqlen, self.n_kv_heads, hd)

        fc = self.freqs_cos[:seqlen]
        fs = self.freqs_sin[:seqlen]
        # Fold 1/sqrt(D) into q's rotary coefficients: zero extra cost, and
        # the flash kernel never re-scales q inside the KV loop.
        scale = 1.0 / math.sqrt(hd)
        q = apply_rotary_emb(q, (fc * scale).astype(dt), (fs * scale).astype(dt))
        k = apply_rotary_emb(k, fc.astype(dt), fs.astype(dt))

        # (B, S, H, D) -> (B, H, S, D)
        # TODO(synk): fuse these transposes (and RoPE) into the flash kernel so
        # q/k/v are consumed straight from the projection layout.
        q = q.transpose(0, 2, 1, 3)
        k = k.transpose(0, 2, 1, 3)
        v = v.transpose(0, 2, 1, 3)

        out = flash_attention(
            q, k, v, n_rep=self.n_rep,
            use_approx_recip=(dt == jnp.dtype(jnp.bfloat16)))   # (B, H, S, D)

        out = out.transpose(0, 2, 1, 3).reshape(bsz * seqlen, self.n_heads * hd)
        out = linear_pallas(out, self.wo_c, out_dtype=jnp.float32)
        return out.reshape(bsz, seqlen, self.dim)

    # pure-JAX f32 reference for the correctness check
    def reference(self, x):
        bsz, seqlen, _ = x.shape
        hd = self.head_dim
        x2d = x.reshape(bsz * seqlen, self.dim)
        q = (x2d @ self.wq).reshape(bsz, seqlen, self.n_heads, hd)
        k = (x2d @ self.wk).reshape(bsz, seqlen, self.n_kv_heads, hd)
        v = (x2d @ self.wv).reshape(bsz, seqlen, self.n_kv_heads, hd)
        fc = self.freqs_cos[:seqlen]
        fs = self.freqs_sin[:seqlen]
        q = apply_rotary_emb(q, fc, fs).transpose(0, 2, 1, 3)
        k = apply_rotary_emb(k, fc, fs).transpose(0, 2, 1, 3)
        v = v.transpose(0, 2, 1, 3)
        k = jnp.repeat(k, self.n_rep, axis=1)
        v = jnp.repeat(v, self.n_rep, axis=1)
        s = jnp.einsum("bhqd,bhkd->bhqk", q, k) / math.sqrt(hd)
        mask = jnp.tril(jnp.ones((seqlen, seqlen), dtype=bool))
        s = jnp.where(mask[None, None], s, -jnp.inf)
        p = jax.nn.softmax(s, axis=-1)
        o = jnp.einsum("bhqk,bhkd->bhqd", p, v)
        o = o.transpose(0, 2, 1, 3).reshape(bsz * seqlen, self.n_heads * hd)
        return (o @ self.wo).reshape(bsz, seqlen, self.dim)


# TODO(synk): KV-cache / SDPA-with-kv-cache branch (use_kv_cache=True) not
# implemented; only the stateless training/prefill path is covered.

if __name__ == "__main__":
    key = jax.random.PRNGKey(0)
    kw, kx = jax.random.split(key)

    # small ModelArgs-consistent shapes: dim=32, n_heads=4, n_kv_heads=2 (GQA),
    # head_dim=8, max_seq_len=16; batch=2, seq=8.
    dim, n_heads, n_kv_heads, max_seq_len = 32, 4, 2, 16
    bsz, seqlen = 2, 8

    x = jax.random.normal(kx, (bsz, seqlen, dim), dtype=jnp.float32)

    # f32 validation path: strict check against the pure-JAX reference.
    attn_f32 = AttentionPallas(dim, n_heads, n_kv_heads, max_seq_len,
                               rope_freq_base=10000.0, key=kw,
                               mxu_dtype=jnp.float32)
    out_f32 = jax.block_until_ready(attn_f32(x))
    ref = jax.block_until_ready(attn_f32.reference(x))
    assert out_f32.shape == (bsz, seqlen, dim)
    assert jnp.allclose(out_f32, ref, atol=1e-4, rtol=1e-4), \
        float(jnp.max(jnp.abs(out_f32 - ref)))

    # default path (bf16 MXU inputs, f32 softmax/accumulation): looser check.
    attn = AttentionPallas(dim, n_heads, n_kv_heads, max_seq_len,
                           rope_freq_base=10000.0, key=kw)
    out = jax.block_until_ready(attn(x)).astype(jnp.float32)
    assert out.shape == (bsz, seqlen, dim)
    assert jnp.allclose(out, ref, atol=2e-1, rtol=2e-1), \
        float(jnp.max(jnp.abs(out - ref)))

    print("KERNEL_OK")
</pallas_src>

<mosaic_0001>
module attributes {stable_mosaic.version = 11 : i64} {
  func.func @_matmul_kernel(%arg0: i32, %arg1: i32, %arg2: i32, %arg3: memref<16x32xf32, #tpu.memory_space<vmem>>, %arg4: memref<32x32xf32, #tpu.memory_space<vmem>>, %arg5: memref<16x32xf32, #tpu.memory_space<vmem>>, %arg6: memref<16x32xf32, #tpu.memory_space<vmem>>) attributes {dimension_semantics = [#tpu.dimension_semantics<parallel>, #tpu.dimension_semantics<parallel>, #tpu.dimension_semantics<arbitrary>], iteration_bounds = array<i64: 1, 1, 1>, scalar_prefetch = 0 : i64, scratch_operands = 1 : i64, tpu.core_type = #tpu.core_type<tc>, window_params = [{transform_indices = @transform_0, window_bounds = array<i64: 16, 32>}, {transform_indices = @transform_1, window_bounds = array<i64: 32, 32>}, {transform_indices = @transform_2, window_bounds = array<i64: 16, 32>}]} {
    %c0_i32 = arith.constant 0 : i32
    %0 = arith.cmpi eq, %arg2, %c0_i32 : i32
    %1 = arith.extui %0 : i1 to i32
    %c0_i32_0 = arith.constant 0 : i32
    %2 = arith.cmpi ne, %1, %c0_i32_0 : i32
    scf.if %2 {
      %cst_10 = arith.constant 0.000000e+00 : f32
      %12 = vector.broadcast %cst_10 : f32 to vector<16x32xf32>
      %c0_11 = arith.constant 0 : index
      %c0_12 = arith.constant 0 : index
      %13 = vector.load %arg6[%c0_11, %c0_12] : memref<16x32xf32, #tpu.memory_space<vmem>>, vector<16x32xf32>
      tpu.vector_store %arg6[%c0_11, %c0_12], %12 {strides = array<i32>} : memref<16x32xf32, #tpu.memory_space<vmem>>, vector<16x32xf32>,
    } else {
    }
    %c0 = arith.constant 0 : index
    %c0_1 = arith.constant 0 : index
    %3 = vector.load %arg6[%c0, %c0_1] : memref<16x32xf32, #tpu.memory_space<vmem>>, vector<16x32xf32>
    %c0_2 = arith.constant 0 : index
    %c0_3 = arith.constant 0 : index
    %4 = vector.load %arg3[%c0_2, %c0_3] : memref<16x32xf32, #tpu.memory_space<vmem>>, vector<16x32xf32>
    %c0_4 = arith.constant 0 : index
    %c0_5 = arith.constant 0 : index
    %5 = vector.load %arg4[%c0_4, %c0_5] : memref<32x32xf32, #tpu.memory_space<vmem>>, vector<32x32xf32>
    %cst = arith.constant dense<0.000000e+00> : vector<16x32xf32>
    %6 = tpu.matmul %4, %5, %cst {dimension_numbers = #tpu.dot_dimension_numbers<[1], [0], [0], [1], [0, 0, 1, 1], [], []>} : vector<16x32xf32>, vector<32x32xf32>, vector<16x32xf32> -> vector<16x32xf32>
    %7 = arith.addf %3, %6 : vector<16x32xf32>
    %c0_6 = arith.constant 0 : index
    %c0_7 = arith.constant 0 : index
    %8 = vector.load %arg6[%c0_6, %c0_7] : memref<16x32xf32, #tpu.memory_space<vmem>>, vector<16x32xf32>
    tpu.vector_store %arg6[%c0_6, %c0_7], %7 {strides = array<i32>} : memref<16x32xf32, #tpu.memory_space<vmem>>, vector<16x32xf32>,
    %c0_i32_8 = arith.constant 0 : i32
    %9 = arith.cmpi eq, %arg2, %c0_i32_8 : i32
    %10 = arith.extui %9 : i1 to i32
    %c0_i32_9 = arith.constant 0 : i32
    %11 = arith.cmpi ne, %10, %c0_i32_9 : i32
    scf.if %11 {
      %c0_10 = arith.constant 0 : index
      %c0_11 = arith.constant 0 : index
      %12 = vector.load %arg6[%c0_10, %c0_11] : memref<16x32xf32, #tpu.memory_space<vmem>>, vector<16x32xf32>
      %c0_12 = arith.constant 0 : index
      %c0_13 = arith.constant 0 : index
      %13 = vector.load %arg5[%c0_12, %c0_13] : memref<16x32xf32, #tpu.memory_space<vmem>>, vector<16x32xf32>
      tpu.vector_store %arg5[%c0_12, %c0_13], %12 {strides = array<i32>} : memref<16x32xf32, #tpu.memory_space<vmem>>, vector<16x32xf32>,
    } else {
    }
    return
  }
  func.func @transform_0(%arg0: i32, %arg1: i32, %arg2: i32) -> (i32, i32) {
    %c0_i32 = arith.constant 0 : i32
    return %arg0, %arg2 : i32, i32
  }
  func.func @transform_1(%arg0: i32, %arg1: i32, %arg2: i32) -> (i32, i32) {
    %c0_i32 = arith.constant 0 : i32
    return %arg2, %arg1 : i32, i32
  }
  func.func @transform_2(%arg0: i32, %arg1: i32, %arg2: i32) -> (i32, i32) {
    %c0_i32 = arith.constant 0 : i32
    return %arg0, %arg1 : i32, i32
  }
}

</mosaic_0001>

<llo_original>
// kernel: tpu_custom_call.1
$region0: #{tpu_custom_call.1}
  #allocation0 [shape = 'u32[]', space=smem, size = 0x4, offset = 0x4, fixed_abs, tag = 'smem constant byte address 0x4 - core index']
  #allocation1 [shape = 'u32[144,128]{1,0:T(1,128)}', space=vmem, size = 0x12000, scoped, tag = 'internal scratch']
  #allocation2 [shape = 'f32[16,32]{1,0:T(8,128)}', space=vmem, size = 0x2000, scoped, tag = 'scratch operand']
  %s0 = inlined_call_operand.hbm [shape: f32[16,32], index: 0, kind: input, shape index: {}]
  %s1 = inlined_call_operand.hbm [shape: f32[32,32], index: 1, kind: input, shape index: {}]
  %s2 = inlined_call_operand.hbm [shape: f32[16,32], index: 2, kind: output, shape index: {}]
  %s3 = sld [smem:[#allocation0]]
  $region34: #{tpu_custom_call.1} parent=0
    _
  %s5 = ssub.s32 1, %s3
  %s6 = scalar_select 0, %s5, %s3
  $region1: #{tpu_custom_call.1} parent=0
    #allocation3 [shape = 'u8[8192]{0}', space=vmem, size = 0x2000, scoped, tag = 'input window, operand 0, single buffered']
    #allocation4 [shape = 's32[1]{0}', space=sflag, size = 0x4, scoped, tag = 'scoped memory for tpu_custom_call.1']
    #allocation5 [shape = 's32[1]{0}', space=sflag, size = 0x4, scoped, tag = 'scoped memory for tpu_custom_call.1']
    #allocation6 [shape = 'u8[16384]{0}', space=vmem, size = 0x4000, scoped, tag = 'input window, operand 1, single buffered']
    #allocation7 [shape = 's32[1]{0}', space=sflag, size = 0x4, scoped, tag = 'scoped memory for tpu_custom_call.1']
    #allocation8 [shape = 'u8[8192]{0}', space=vmem, size = 0x2000, scoped, tag = 'output window, operand 0, single buffered']
    %7 = vsyncpa [#allocation4], 0
    %8 = vsyncpa [#allocation7], 0
    %9 = vsyncpa [#allocation5], 0
    // Predicated region
    $region2: #{tpu_custom_call.1} parent=1 // pred_check
      _
    $region3: #{tpu_custom_call.1} parent=1 // pred_check_branch
      %11 = sbr.rel (0) target = $region5
    $region4: #{tpu_custom_call.1} parent=1 // pred_region
      %s13 = ssub.s32 256, 256
      %14 = vsyncadd [#allocation4], %s13
      %s15 = sshll.u32 [#allocation3], 4
      %s16 = int_to_ptr.vmem [resolvable:$true] %s15
      %21 = dma.hbm_to_vmem [thread:$0]  %s0, 256, %s16, [#allocation4], 128, 128, 8
    $region5: #{tpu_custom_call.1} parent=1 // pred_fallthru
      _
    // Predicated region
    $region6: #{tpu_custom_call.1} parent=1 // pred_check
      _
    $region7: #{tpu_custom_call.1} parent=1 // pred_check_branch
      %23 = sbr.rel (0) target = $region9
    $region8: #{tpu_custom_call.1} parent=1 // pred_region
      %s25 = ssub.s32 512, 512
      %26 = vsyncadd [#allocation7], %s25
      %s27 = sshll.u32 [#allocation6], 4
      %s28 = int_to_ptr.vmem [resolvable:$true] %s27
      %33 = dma.hbm_to_vmem [thread:$0]  %s1, 512, %s28, [#allocation7], 128, 128, 8
    $region9: #{tpu_custom_call.1} parent=1 // pred_fallthru
      _
    // Predicated region
    $region10: #{tpu_custom_call.1} parent=1 // pred_check
      _
    $region11: #{tpu_custom_call.1} parent=1 // pred_check_branch
      %35 = sbr.rel (0) target = $region13
    $region12: #{tpu_custom_call.1} parent=1 // pred_region
      %36 = dma.done [#allocation4], 256
    $region13: #{tpu_custom_call.1} parent=1 // pred_fallthru
      _
    // Predicated region
    $region14: #{tpu_custom_call.1} parent=1 // pred_check
      _
    $region15: #{tpu_custom_call.1} parent=1 // pred_check_branch
      %38 = sbr.rel (0) target = $region17
    $region16: #{tpu_custom_call.1} parent=1 // pred_region
      %39 = dma.done [#allocation7], 512
    $region17: #{tpu_custom_call.1} parent=1 // pred_fallthru
      _
    %p40 = scmp.eq.s32.totalorder 0, 0
    // Predicated region
    $region18: #{tpu_custom_call.1} parent=1 // pred_check
      %p41 = pneg %p40
    $region19: #{tpu_custom_call.1} parent=1 // pred_check_branch
      %43 = sbr.rel (%p41) target = $region21
    $region20: #{tpu_custom_call.1} parent=1 // pred_region
      %vm44 = vcmask 261120
      %45 = vst.msk [vmem:[#allocation2] sm:$0xff] %vm44, 0.0
      %46 = vst.msk [vmem:[#allocation2 + $0x8] sm:$0xff] %vm44, 0.0
    $region21: #{tpu_custom_call.1} parent=1 // pred_fallthru
      _
    %v47 = vld [vmem:[#allocation2] sm:$0xff]
    %v48 = vld [vmem:[#allocation2 + $0x8] sm:$0xff]
    %v49 = vld [vmem:[#allocation3] sm:$0xff]
    %v50 = vld [vmem:[#allocation3 + $0x8] sm:$0xff]
    %v51 = vld [vmem:[#allocation6] sm:$0xff]
    %v52 = vld [vmem:[#allocation6 + $0x8] sm:$0xff]
    %v53 = vld [vmem:[#allocation6 + $0x10] sm:$0xff]
    %v54 = vld [vmem:[#allocation6 + $0x18] sm:$0xff]
    %vm55 = vcmask 261120
    %v57 = vsel %vm55, %v49, 0
    %v60 = vsel %vm55, %v50, 0
    %62 = vmatprep.subr.mxu0 0.0
    %63 = vmatpush1.msra.mxu0 0.0
    %64 = vmatprep.subr.mxu0 0.0
    %65 = vmatpush1.msra.mxu0 0.0
    %66 = vmatprep.subr.mxu0 0.0
    %67 = vmatpush1.msra.mxu0 0.0
    %68 = vmatprep.subr.mxu0 0.0
    %69 = vmatpush1.msra.mxu0 0.0
    %70 = vmatprep.subr.mxu0 0.0
    %71 = vmatpush1.msra.mxu0 0.0
    %72 = vmatprep.subr.mxu0 0.0
    %73 = vmatpush1.msra.mxu0 0.0
    %74 = vmatprep.subr.mxu0 0.0
    %75 = vmatpush1.msra.mxu0 0.0
    %76 = vmatprep.subr.mxu0 0.0
    %77 = vmatpush1.msra.mxu0 0.0
    %78 = vmatprep.subr.mxu0 0.0
    %79 = vmatpush1.msra.mxu0 0.0
    %80 = vmatprep.subr.mxu0 0.0
    %81 = vmatpush1.msra.mxu0 0.0
    %82 = vmatprep.subr.mxu0 0.0
    %83 = vmatpush1.msra.mxu0 0.0
    %84 = vmatprep.subr.mxu0 0.0
    %85 = vmatpush1.msra.mxu0 0.0
    %86 = vmatprep.subr.mxu0 0.0
    %87 = vmatpush1.msra.mxu0 %v54
    %88 = vmatprep.subr.mxu0 0.0
    %89 = vmatpush1.msra.mxu0 %v53
    %90 = vmatprep.subr.mxu0 0.0
    %91 = vmatpush1.msra.mxu0 %v52
    %92 = vmatprep.subr.mxu0 0.0
    %93 = vmatpush1.msra.mxu0 %v51
    %94 = vmatprep.subr.mxu0 0.0
    %95 = vmatpush2.msra.mxu0 0.0
    %96 = vmatprep.subr.mxu0 0.0
    %97 = vmatpush2.msra.mxu0 0.0
    %98 = vmatprep.subr.mxu0 0.0
    %99 = vmatpush2.msra.mxu0 0.0
    %100 = vmatprep.subr.mxu0 0.0
    %101 = vmatpush2.msra.mxu0 0.0
    %102 = vmatprep.subr.mxu0 0.0
    %103 = vmatpush2.msra.mxu0 0.0
    %104 = vmatprep.subr.mxu0 0.0
    %105 = vmatpush2.msra.mxu0 0.0
    %106 = vmatprep.subr.mxu0 0.0
    %107 = vmatpush2.msra.mxu0 0.0
    %108 = vmatprep.subr.mxu0 0.0
    %109 = vmatpush2.msra.mxu0 0.0
    %110 = vmatprep.subr.mxu0 0.0
    %111 = vmatpush2.msra.mxu0 0.0
    %112 = vmatprep.subr.mxu0 0.0
    %113 = vmatpush2.msra.mxu0 0.0
    %114 = vmatprep.subr.mxu0 0.0
    %115 = vmatpush2.msra.mxu0 0.0
    %116 = vmatprep.subr.mxu0 0.0
    %117 = vmatpush2.msra.mxu0 0.0
    %118 = vmatprep.subr.mxu0 0.0
    %119 = vmatpush2.msra.mxu0 0.0
    %120 = vmatprep.subr.mxu0 0.0
    %121 = vmatpush2.msra.mxu0 0.0
    %122 = vmatprep.subr.mxu0 0.0
    %123 = vmatpush2.msra.mxu0 0.0
    %124 = vmatprep.subr.mxu0 0.0
    %125 = vmatpush2.msra.mxu0 0.0
    %126 = vmatprep.mubr.f32.mxu0 0.0
    %127 = vmatmul.mubr.f32.gmra.mxu0 %v57
    %v128 = vpop.f32.mrf.mxu0
    %v129 = vadd.f32 0.0, %v128
    %v130 = vpop.f32.mrf.mxu0
    %131 = vmatprep.mubr.f32.mxu0 0.0
    %132 = vmatmul.mubr.f32.gmra.mxu0 %v60
    %v133 = vpop.f32.mrf.mxu0
    %v134 = vadd.f32 0.0, %v133
    %v135 = vpop.f32.mrf.mxu0
    %136 = vdwg.mxu0
    %v137 = vadd.f32 %v47, %v129
    %v138 = vadd.f32 %v48, %v134
    %139 = vst.msk [vmem:[#allocation2] sm:$0xff] %vm55, %v137
    %140 = vst.msk [vmem:[#allocation2 + $0x8] sm:$0xff] %vm55, %v138
    // Predicated region
    $region22: #{tpu_custom_call.1} parent=1 // pred_check
      %p141 = pneg %p40
    $region23: #{tpu_custom_call.1} parent=1 // pred_check_branch
      %143 = sbr.rel (%p141) target = $region25
    $region24: #{tpu_custom_call.1} parent=1 // pred_region
      %v144 = vld [vmem:[#allocation2] sm:$0xff]
      %v145 = vld [vmem:[#allocation2 + $0x8] sm:$0xff]
      %146 = vst.msk [vmem:[#allocation8] sm:$0xff] %vm55, %v144
      %147 = vst.msk [vmem:[#allocation8 + $0x8] sm:$0xff] %vm55, %v145
    $region25: #{tpu_custom_call.1} parent=1 // pred_fallthru
      _
    // Predicated region
    $region26: #{tpu_custom_call.1} parent=1 // pred_check
      _
    $region27: #{tpu_custom_call.1} parent=1 // pred_check_branch
      %149 = sbr.rel (0) target = $region29
    $region28: #{tpu_custom_call.1} parent=1 // pred_region
      %s151 = ssub.s32 256, 256
      %152 = vsyncadd [#allocation5], %s151
      %s153 = sshll.u32 [#allocation8], 4
      %s154 = int_to_ptr.vmem [resolvable:$true] %s153
      %159 = dma.vmem_to_hbm [thread:$0]  %s154, 256, %s2, [#allocation5], 128, 128, 8
    $region29: #{tpu_custom_call.1} parent=1 // pred_fallthru
      _
    // Predicated region
    $region30: #{tpu_custom_call.1} parent=1 // pred_check
      _
    $region31: #{tpu_custom_call.1} parent=1 // pred_check_branch
      %161 = sbr.rel (0) target = $region33
    $region32: #{tpu_custom_call.1} parent=1 // pred_region
      %162 = dma.done [#allocation5], 256
    $region33: #{tpu_custom_call.1} parent=1 // pred_fallthru
      _
    %163 = vsyncpa [#allocation4], 1
    %164 = vsyncpa [#allocation7], 1
    %165 = vsyncpa [#allocation5], 1

</llo_original>
